<compile_context>
chip_gen: v7x
topology: tpu7x:2x2x1
jax: 0.10.0
libtpu: 0.0.40
codegen_flags: <defaults>
</compile_context>

<pallas_src>
import numpy as np
import jax
import jax.numpy as jnp
from jax.experimental import pallas as pl
from jax.experimental.pallas import tpu as pltpu


_LANES = 128
_SUBLANE_ALIGN = 16          # bf16-pack friendly sublane alignment


def _round_up(x, m):
    return (x + m - 1) // m * m


def afm_kernel(emb_ref, lin_ref, w_attn_ref, aux_ref, w_fc_ref, o_ref, prod_ref):
    """Refs:
      emb_ref  : (F, TILE_B, D)    bf16 per-field embeddings (field-major)
      lin_ref  : (TILE_B, NA_pad)  f32 FeaturesLinear term (+ lin_bias + b_fc), lane-padded
      w_attn   : (D, A)            bf16 attention Linear weight
      aux      : (2, A)            f32: row0 = attention bias, row1 = projection weight row
      w_fc     : (D, NA_pad)       bf16 AFM scoring head weight, lane-padded
      o_ref    : (TILE_B, NA_pad)  f32 sigmoid probabilities (lane-dense store)
      prod_ref : (P*TILE_B, D)     f32 VMEM scratch holding all pairwise products
    """
    F, TB, D = emb_ref.shape
    P = F * (F - 1) // 2

    b_attn = aux_ref[0:1, :]                 # (1, A)
    w_proj = aux_ref[1:2, :]                 # (1, A)

    # ---- Pass 1: all pairwise field products -> VMEM scratch (pair-major). ----
    idx = 0
    for i in range(F - 1):
        fi = emb_ref[i].astype(jnp.float32)                       # (TB, D)
        for j in range(i + 1, F):
            fj = emb_ref[j].astype(jnp.float32)
            prod_ref[pl.ds(idx * TB, TB), :] = fi * fj
            idx += 1

    # ---- One batched MXU matmul for all P pairs' attention activations. ----
    a = jnp.dot(prod_ref[...].astype(jnp.bfloat16), w_attn_ref[...],
                preferred_element_type=jnp.float32) + b_attn      # (P*TB, A)
    a = jnp.maximum(a, 0.0)                                       # relu
    # Projection Linear(A, 1) as a single lane reduce (avoids an N=1 MXU matmul);
    # its bias is a constant shift over the pair axis and cancels exactly in the softmax.
    s = jnp.sum(a * w_proj, axis=-1, keepdims=True)               # (P*TB, 1)

    # ---- Softmax over the pair axis (static slices, single EUP exp). ----
    m = s[0:TB, :]
    for p in range(1, P):
        m = jnp.maximum(m, s[p * TB:(p + 1) * TB, :])
    e = jnp.exp(s - jnp.concatenate([m] * P, axis=0))             # (P*TB, 1), one exp issue
    denom = e[0:TB, :]
    for p in range(1, P):
        denom = denom + e[p * TB:(p + 1) * TB, :]
    inv = pl.reciprocal(denom, approx=True)                       # (TB, 1) EUP vrcp

    # TODO(synk): training-mode dropouts (attention weights / pooled output) omitted
    # (inference-time identity).

    # ---- Pass 2: attention-weighted pooling, re-reading products from VMEM scratch. ----
    attn_out = (e[0:TB, :] * inv) * prod_ref[pl.ds(0, TB), :]
    for p in range(1, P):
        w_p = e[p * TB:(p + 1) * TB, :] * inv                     # (TB, 1)
        attn_out = attn_out + w_p * prod_ref[pl.ds(p * TB, TB), :]

    # ---- AFM scoring head + linear term + sigmoid (lane-dense output store). ----
    logits = jnp.dot(attn_out.astype(jnp.bfloat16), w_fc_ref[...],
                     preferred_element_type=jnp.float32) + lin_ref[...]
    o_ref[...] = jax.nn.sigmoid(logits)


def afm_pallas(emb_fmajor, lin, w_attn, attn_aux, w_fc, *, max_tile_b=1024):
    """emb_fmajor: (F, B, D), lin: (B, num_ADR) f32 (all biases folded in)
       -> (B, num_ADR) f32 probabilities."""
    F, B, D = emb_fmajor.shape
    num_adr = w_fc.shape[1]
    A = w_attn.shape[1]
    P = F * (F - 1) // 2

    # Batch tiling: 16-sublane aligned (bf16 packing).  Aim for >= 2 grid steps so
    # the "parallel" batch axis can shard across v7x's two TensorCores.
    max_tile_b = max(_SUBLANE_ALIGN, _round_up(max_tile_b, _SUBLANE_ALIGN))
    B_align = _round_up(B, _SUBLANE_ALIGN)
    half_b = _round_up((B_align + 1) // 2, _SUBLANE_ALIGN)
    tile_b = min(max_tile_b, half_b)
    B_pad = _round_up(B_align, tile_b)

    # Lane-dense head: pad num_ADR to a multiple of 128 so the output store is an
    # unmasked full-lane vst and the writeback DMA is lane-dense.
    na_pad = _round_up(num_adr, _LANES)

    if B_pad != B:
        emb_fmajor = jnp.pad(emb_fmajor, ((0, 0), (0, B_pad - B), (0, 0)))
        lin = jnp.pad(lin, ((0, B_pad - B), (0, 0)))
    if na_pad != num_adr:
        lin = jnp.pad(lin, ((0, 0), (0, na_pad - num_adr)))
        w_fc = jnp.pad(w_fc, ((0, 0), (0, na_pad - num_adr)))

    emb_fmajor = emb_fmajor.astype(jnp.bfloat16)      # bf16 activation DMA
    w_attn_bf16 = w_attn.astype(jnp.bfloat16)         # bf16 MXU operands, f32 accum
    w_fc_bf16 = w_fc.astype(jnp.bfloat16)
    lin = lin.astype(jnp.float32)
    attn_aux = attn_aux.astype(jnp.float32)

    cost = pl.CostEstimate(
        flops=int(B_pad * (P * D + 2 * P * D * A + 4 * P * A + 3 * P * D
                           + 2 * D * na_pad + 2 * na_pad + 6 * P)),
        transcendentals=int(B_pad * (P + na_pad)),
        bytes_accessed=int(2 * B_pad * F * D + 4 * B_pad * na_pad   # emb (bf16) + lin
                           + 4 * B_pad * na_pad                      # output
                           + 2 * D * A + 4 * 2 * A + 2 * D * na_pad),
    )

    grid = (B_pad // tile_b,)
    out = pl.pallas_call(
        afm_kernel,
        out_shape=jax.ShapeDtypeStruct((B_pad, na_pad), jnp.float32),
        grid_spec=pltpu.PrefetchScalarGridSpec(
            num_scalar_prefetch=0,
            grid=grid,
            in_specs=[
                pl.BlockSpec((F, tile_b, D), lambda i: (0, i, 0)),    # embeddings (bf16)
                pl.BlockSpec((tile_b, na_pad), lambda i: (i, 0)),     # linear term (+ biases)
                pl.BlockSpec((D, A), lambda i: (0, 0)),               # attention W (bf16)
                pl.BlockSpec((2, A), lambda i: (0, 0)),               # packed attn bias + proj row
                pl.BlockSpec((D, na_pad), lambda i: (0, 0)),          # fc W (bf16, lane-padded)
            ],
            out_specs=pl.BlockSpec((tile_b, na_pad), lambda i: (i, 0)),
            scratch_shapes=[pltpu.VMEM((P * tile_b, D), jnp.float32)],
        ),
        compiler_params=pltpu.CompilerParams(
            dimension_semantics=("parallel",)),
        cost_estimate=cost,
    )(emb_fmajor, lin, w_attn_bf16, attn_aux, w_fc_bf16)
    return out[:B, :num_adr]


def drug_afm_forward(x, params):
    """x: (B, num_fields) int32 ids -> (B, num_ADR) f32 probabilities."""
    ids = x.T + params["offsets"][:, None]                        # (F, B): field-major gather,
    # no post-gather transpose (saves an extra HBM pass over B*F*D bytes).
    emb_fmajor = params["embedding"][ids]                         # (F, B, D) bf16 table
    lin = (params["lin_weight"][ids].sum(axis=0)                  # (B, num_ADR)
           + params["lin_bias"][None, :]
           + params["b_fc"])                                      # fold fc bias into linear term
    return afm_pallas(emb_fmajor, lin, params["w_attn"], params["attn_aux"],
                      params["w_fc"])


def afm_reference(x, params):
    """Pure-JAX reference of the same forward (f32 math, bf16 table upcast)."""
    ids = x.T + params["offsets"][:, None]                        # (F, B)
    e = params["embedding"][ids].astype(jnp.float32)              # (F, B, D)
    lin = (params["lin_weight"][ids].sum(axis=0)
           + params["lin_bias"][None, :] + params["b_fc"])
    F = e.shape[0]
    rows, cols = zip(*[(i, j) for i in range(F - 1) for j in range(i + 1, F)])
    inner = e[jnp.asarray(rows)] * e[jnp.asarray(cols)]           # (P, B, D)
    attn = jax.nn.relu(jnp.einsum('pbd,da->pba', inner, params["w_attn"])
                       + params["attn_aux"][0])
    score = (attn * params["attn_aux"][1]).sum(-1, keepdims=True)  # (P, B, 1)
    w = jax.nn.softmax(score, axis=0)
    attn_out = (w * inner).sum(axis=0)                            # (B, D)
    logits = attn_out @ params["w_fc"] + lin
    return jax.nn.sigmoid(logits)


def init_params(key, field_dims, embed_dim, attn_size, num_adr):
    total = int(np.sum(field_dims))
    offsets = jnp.asarray(
        np.concatenate([[0], np.cumsum(field_dims)[:-1]]).astype(np.int32))

    keys = jax.random.split(key, 7)
    # FeaturesEmbedding: xavier-uniform table, stored bf16 in HBM (half the gather bytes).
    limit = float(np.sqrt(6.0 / (total + embed_dim)))
    embedding = jax.random.uniform(keys[0], (total, embed_dim),
                                   jnp.float32, -limit, limit).astype(jnp.bfloat16)
    # FeaturesLinear: per-feature weights (num_ADR wide) + zero bias.
    lin_weight = jax.random.normal(keys[1], (total, num_adr), jnp.float32) * 0.01
    lin_bias = jnp.zeros((num_adr,), jnp.float32)
    # AFM attention Linear(embed_dim, attn_size) + projection Linear(attn_size, 1).
    w_attn = jax.random.normal(keys[2], (embed_dim, attn_size), jnp.float32) / np.sqrt(embed_dim)
    b_attn = jax.random.normal(keys[3], (attn_size,), jnp.float32) * 0.01
    w_proj = jax.random.normal(keys[4], (attn_size,), jnp.float32) / np.sqrt(attn_size)
    # (projection bias omitted: constant shift over the pair axis, cancels in softmax)
    # AFM scoring head Linear(embed_dim, num_ADR) (scoring=False => num_ADR wide).
    w_fc = jax.random.normal(keys[5], (embed_dim, num_adr), jnp.float32) / np.sqrt(embed_dim)
    b_fc = jax.random.normal(keys[6], (1, num_adr), jnp.float32) * 0.01

    attn_aux = jnp.stack([b_attn, w_proj], axis=0)                # (2, A) packed slab
    return {"offsets": offsets, "embedding": embedding,
            "lin_weight": lin_weight, "lin_bias": lin_bias,
            "w_attn": w_attn, "attn_aux": attn_aux,
            "w_fc": w_fc, "b_fc": b_fc}


if __name__ == "__main__":
    key = jax.random.PRNGKey(0)
    field_dims = [5, 7, 4, 9]        # 4 categorical fields
    embed_dim = 32
    attn_size = 16
    num_adr = 16
    dropouts = (0.2, 0.2)            # inference: identity (unused)
    batch = 8

    k_param, k_x = jax.random.split(key)
    params = init_params(k_param, field_dims, embed_dim, attn_size, num_adr)

    # deterministic ids, each within its field's cardinality
    kx = jax.random.split(k_x, len(field_dims))
    cols = [jax.random.randint(kx[f], (batch,), 0, fd, dtype=jnp.int32)
            for f, fd in enumerate(field_dims)]
    x = jnp.stack(cols, axis=1)      # (batch, num_fields) int32

    y = drug_afm_forward(x, params)
    y = jax.block_until_ready(y)

    assert y.shape == (batch, num_adr), y.shape
    assert bool(jnp.all(jnp.isfinite(y)))
    assert bool(jnp.all((y >= 0.0) & (y <= 1.0)))

    # correctness check against a pure-JAX f32 reference (tolerance covers the
    # bf16 MXU operands and the approx reciprocal)
    y_ref = jax.block_until_ready(afm_reference(x, params))
    np.testing.assert_allclose(np.asarray(y), np.asarray(y_ref),
                               rtol=1e-2, atol=1e-2)

    print("KERNEL_OK")
</pallas_src>

<mosaic_0001>
module attributes {stable_mosaic.version = 11 : i64} {
  func.func @afm_kernel(%arg0: i32, %arg1: memref<4x16x32xbf16, #tpu.memory_space<vmem>>, %arg2: memref<16x128xf32, #tpu.memory_space<vmem>>, %arg3: memref<32x16xbf16, #tpu.memory_space<vmem>>, %arg4: memref<2x16xf32, #tpu.memory_space<vmem>>, %arg5: memref<32x128xbf16, #tpu.memory_space<vmem>>, %arg6: memref<16x128xf32, #tpu.memory_space<vmem>>, %arg7: memref<96x32xf32, #tpu.memory_space<vmem>>) attributes {dimension_semantics = [#tpu.dimension_semantics<parallel>], iteration_bounds = array<i64: 1>, scalar_prefetch = 0 : i64, scratch_operands = 1 : i64, tpu.core_type = #tpu.core_type<tc>, window_params = [{transform_indices = @transform_0, window_bounds = array<i64: 4, 16, 32>}, {transform_indices = @transform_1, window_bounds = array<i64: 16, 128>}, {pipeline_mode = #tpu.pipeline_mode<synchronous>, transform_indices = @transform_2, window_bounds = array<i64: 32, 16>}, {pipeline_mode = #tpu.pipeline_mode<synchronous>, transform_indices = @transform_3, window_bounds = array<i64: 2, 16>}, {pipeline_mode = #tpu.pipeline_mode<synchronous>, transform_indices = @transform_4, window_bounds = array<i64: 32, 128>}, {transform_indices = @transform_5, window_bounds = array<i64: 16, 128>}]} {
    %c0 = arith.constant 0 : index
    %c0_0 = arith.constant 0 : index
    %0 = vector.load %arg4[%c0, %c0_0] : memref<2x16xf32, #tpu.memory_space<vmem>>, vector<1x16xf32>
    %c1 = arith.constant 1 : index
    %c0_1 = arith.constant 0 : index
    %1 = vector.load %arg4[%c1, %c0_1] : memref<2x16xf32, #tpu.memory_space<vmem>>, vector<1x16xf32>
    %c0_2 = arith.constant 0 : index
    %c0_3 = arith.constant 0 : index
    %c0_4 = arith.constant 0 : index
    %2 = vector.load %arg1[%c0_2, %c0_3, %c0_4] : memref<4x16x32xbf16, #tpu.memory_space<vmem>>, vector<1x16x32xbf16>
    %3 = vector.shape_cast %2 : vector<1x16x32xbf16> to vector<16x32xbf16>
    %4 = arith.extf %3 : vector<16x32xbf16> to vector<16x32xf32>
    %c1_5 = arith.constant 1 : index
    %c0_6 = arith.constant 0 : index
    %c0_7 = arith.constant 0 : index
    %5 = vector.load %arg1[%c1_5, %c0_6, %c0_7] : memref<4x16x32xbf16, #tpu.memory_space<vmem>>, vector<1x16x32xbf16>
    %6 = vector.shape_cast %5 : vector<1x16x32xbf16> to vector<16x32xbf16>
    %7 = arith.extf %6 : vector<16x32xbf16> to vector<16x32xf32>
    %8 = arith.mulf %4, %7 : vector<16x32xf32>
    %c0_8 = arith.constant 0 : index
    %c0_9 = arith.constant 0 : index
    %9 = vector.load %arg7[%c0_8, %c0_9] : memref<96x32xf32, #tpu.memory_space<vmem>>, vector<16x32xf32>
    tpu.vector_store %arg7[%c0_8, %c0_9], %8 {strides = array<i32>} : memref<96x32xf32, #tpu.memory_space<vmem>>, vector<16x32xf32>,
    %c2 = arith.constant 2 : index
    %c0_10 = arith.constant 0 : index
    %c0_11 = arith.constant 0 : index
    %10 = vector.load %arg1[%c2, %c0_10, %c0_11] : memref<4x16x32xbf16, #tpu.memory_space<vmem>>, vector<1x16x32xbf16>
    %11 = vector.shape_cast %10 : vector<1x16x32xbf16> to vector<16x32xbf16>
    %12 = arith.extf %11 : vector<16x32xbf16> to vector<16x32xf32>
    %13 = arith.mulf %4, %12 : vector<16x32xf32>
    %c16 = arith.constant 16 : index
    %c0_12 = arith.constant 0 : index
    %14 = vector.load %arg7[%c16, %c0_12] : memref<96x32xf32, #tpu.memory_space<vmem>>, vector<16x32xf32>
    tpu.vector_store %arg7[%c16, %c0_12], %13 {strides = array<i32>} : memref<96x32xf32, #tpu.memory_space<vmem>>, vector<16x32xf32>,
    %c3 = arith.constant 3 : index
    %c0_13 = arith.constant 0 : index
    %c0_14 = arith.constant 0 : index
    %15 = vector.load %arg1[%c3, %c0_13, %c0_14] : memref<4x16x32xbf16, #tpu.memory_space<vmem>>, vector<1x16x32xbf16>
    %16 = vector.shape_cast %15 : vector<1x16x32xbf16> to vector<16x32xbf16>
    %17 = arith.extf %16 : vector<16x32xbf16> to vector<16x32xf32>
    %18 = arith.mulf %4, %17 : vector<16x32xf32>
    %c32 = arith.constant 32 : index
    %c0_15 = arith.constant 0 : index
    %19 = vector.load %arg7[%c32, %c0_15] : memref<96x32xf32, #tpu.memory_space<vmem>>, vector<16x32xf32>
    tpu.vector_store %arg7[%c32, %c0_15], %18 {strides = array<i32>} : memref<96x32xf32, #tpu.memory_space<vmem>>, vector<16x32xf32>,
    %c1_16 = arith.constant 1 : index
    %c0_17 = arith.constant 0 : index
    %c0_18 = arith.constant 0 : index
    %20 = vector.load %arg1[%c1_16, %c0_17, %c0_18] : memref<4x16x32xbf16, #tpu.memory_space<vmem>>, vector<1x16x32xbf16>
    %21 = vector.shape_cast %20 : vector<1x16x32xbf16> to vector<16x32xbf16>
    %22 = arith.extf %21 : vector<16x32xbf16> to vector<16x32xf32>
    %c2_19 = arith.constant 2 : index
    %c0_20 = arith.constant 0 : index
    %c0_21 = arith.constant 0 : index
    %23 = vector.load %arg1[%c2_19, %c0_20, %c0_21] : memref<4x16x32xbf16, #tpu.memory_space<vmem>>, vector<1x16x32xbf16>
    %24 = vector.shape_cast %23 : vector<1x16x32xbf16> to vector<16x32xbf16>
    %25 = arith.extf %24 : vector<16x32xbf16> to vector<16x32xf32>
    %26 = arith.mulf %22, %25 : vector<16x32xf32>
    %c48 = arith.constant 48 : index
    %c0_22 = arith.constant 0 : index
    %27 = vector.load %arg7[%c48, %c0_22] : memref<96x32xf32, #tpu.memory_space<vmem>>, vector<16x32xf32>
    tpu.vector_store %arg7[%c48, %c0_22], %26 {strides = array<i32>} : memref<96x32xf32, #tpu.memory_space<vmem>>, vector<16x32xf32>,
    %c3_23 = arith.constant 3 : index
    %c0_24 = arith.constant 0 : index
    %c0_25 = arith.constant 0 : index
    %28 = vector.load %arg1[%c3_23, %c0_24, %c0_25] : memref<4x16x32xbf16, #tpu.memory_space<vmem>>, vector<1x16x32xbf16>
    %29 = vector.shape_cast %28 : vector<1x16x32xbf16> to vector<16x32xbf16>
    %30 = arith.extf %29 : vector<16x32xbf16> to vector<16x32xf32>
    %31 = arith.mulf %22, %30 : vector<16x32xf32>
    %c64 = arith.constant 64 : index
    %c0_26 = arith.constant 0 : index
    %32 = vector.load %arg7[%c64, %c0_26] : memref<96x32xf32, #tpu.memory_space<vmem>>, vector<16x32xf32>
    tpu.vector_store %arg7[%c64, %c0_26], %31 {strides = array<i32>} : memref<96x32xf32, #tpu.memory_space<vmem>>, vector<16x32xf32>,
    %c2_27 = arith.constant 2 : index
    %c0_28 = arith.constant 0 : index
    %c0_29 = arith.constant 0 : index
    %33 = vector.load %arg1[%c2_27, %c0_28, %c0_29] : memref<4x16x32xbf16, #tpu.memory_space<vmem>>, vector<1x16x32xbf16>
    %34 = vector.shape_cast %33 : vector<1x16x32xbf16> to vector<16x32xbf16>
    %35 = arith.extf %34 : vector<16x32xbf16> to vector<16x32xf32>
    %c3_30 = arith.constant 3 : index
    %c0_31 = arith.constant 0 : index
    %c0_32 = arith.constant 0 : index
    %36 = vector.load %arg1[%c3_30, %c0_31, %c0_32] : memref<4x16x32xbf16, #tpu.memory_space<vmem>>, vector<1x16x32xbf16>
    %37 = vector.shape_cast %36 : vector<1x16x32xbf16> to vector<16x32xbf16>
    %38 = arith.extf %37 : vector<16x32xbf16> to vector<16x32xf32>
    %39 = arith.mulf %35, %38 : vector<16x32xf32>
    %c80 = arith.constant 80 : index
    %c0_33 = arith.constant 0 : index
    %40 = vector.load %arg7[%c80, %c0_33] : memref<96x32xf32, #tpu.memory_space<vmem>>, vector<16x32xf32>
    tpu.vector_store %arg7[%c80, %c0_33], %39 {strides = array<i32>} : memref<96x32xf32, #tpu.memory_space<vmem>>, vector<16x32xf32>,
    %c0_34 = arith.constant 0 : index
    %c0_35 = arith.constant 0 : index
    %41 = vector.load %arg7[%c0_34, %c0_35] : memref<96x32xf32, #tpu.memory_space<vmem>>, vector<96x32xf32>
    %42 = arith.truncf %41 : vector<96x32xf32> to vector<96x32xbf16>
    %c0_36 = arith.constant 0 : index
    %c0_37 = arith.constant 0 : index
    %43 = vector.load %arg3[%c0_36, %c0_37] : memref<32x16xbf16, #tpu.memory_space<vmem>>, vector<32x16xbf16>
    %cst = arith.constant dense<0.000000e+00> : vector<96x16xf32>
    %44 = tpu.matmul %42, %43, %cst {dimension_numbers = #tpu.dot_dimension_numbers<[1], [0], [0], [1], [0, 0, 1, 1], [], []>} : vector<96x32xbf16>, vector<32x16xbf16>, vector<96x16xf32> -> vector<96x16xf32>
    %45 = vector.broadcast %0 : vector<1x16xf32> to vector<96x16xf32>
    %46 = arith.addf %44, %45 : vector<96x16xf32>
    %cst_38 = arith.constant 0.000000e+00 : f32
    %47 = vector.broadcast %cst_38 : f32 to vector<96x16xf32>
    %48 = arith.maximumf %46, %47 : vector<96x16xf32>
    %49 = vector.broadcast %1 : vector<1x16xf32> to vector<96x16xf32>
    %50 = arith.mulf %48, %49 : vector<96x16xf32>
    %cst_39 = arith.constant dense<0.000000e+00> : vector<96xf32>
    %51 = vector.multi_reduction <add>, %50, %cst_39 [1] : vector<96x16xf32> to vector<96xf32>
    %52 = vector.shape_cast %51 : vector<96xf32> to vector<96x1xf32>
    %53 = vector.extract_strided_slice %52 {offsets = [0, 0], sizes = [16, 1], strides = [1, 1]} : vector<96x1xf32> to vector<16x1xf32>
    %54 = vector.extract_strided_slice %52 {offsets = [16, 0], sizes = [16, 1], strides = [1, 1]} : vector<96x1xf32> to vector<16x1xf32>
    %55 = arith.maximumf %53, %54 : vector<16x1xf32>
    %56 = vector.extract_strided_slice %52 {offsets = [32, 0], sizes = [16, 1], strides = [1, 1]} : vector<96x1xf32> to vector<16x1xf32>
    %57 = arith.maximumf %55, %56 : vector<16x1xf32>
    %58 = vector.extract_strided_slice %52 {offsets = [48, 0], sizes = [16, 1], strides = [1, 1]} : vector<96x1xf32> to vector<16x1xf32>
    %59 = arith.maximumf %57, %58 : vector<16x1xf32>
    %60 = vector.extract_strided_slice %52 {offsets = [64, 0], sizes = [16, 1], strides = [1, 1]} : vector<96x1xf32> to vector<16x1xf32>
    %61 = arith.maximumf %59, %60 : vector<16x1xf32>
    %62 = vector.extract_strided_slice %52 {offsets = [80, 0], sizes = [16, 1], strides = [1, 1]} : vector<96x1xf32> to vector<16x1xf32>
    %63 = arith.maximumf %61, %62 : vector<16x1xf32>
    %64 = tpu.concatenate %63, %63, %63, %63, %63, %63 in 0 : vector<16x1xf32>, vector<16x1xf32>, vector<16x1xf32>, vector<16x1xf32>, vector<16x1xf32>, vector<16x1xf32> -> vector<96x1xf32>
    %65 = arith.subf %52, %64 : vector<96x1xf32>
    %66 = math.exp %65 : vector<96x1xf32>
    %67 = vector.extract_strided_slice %66 {offsets = [0, 0], sizes = [16, 1], strides = [1, 1]} : vector<96x1xf32> to vector<16x1xf32>
    %68 = vector.extract_strided_slice %66 {offsets = [16, 0], sizes = [16, 1], strides = [1, 1]} : vector<96x1xf32> to vector<16x1xf32>
    %69 = arith.addf %67, %68 : vector<16x1xf32>
    %70 = vector.extract_strided_slice %66 {offsets = [32, 0], sizes = [16, 1], strides = [1, 1]} : vector<96x1xf32> to vector<16x1xf32>
    %71 = arith.addf %69, %70 : vector<16x1xf32>
    %72 = vector.extract_strided_slice %66 {offsets = [48, 0], sizes = [16, 1], strides = [1, 1]} : vector<96x1xf32> to vector<16x1xf32>
    %73 = arith.addf %71, %72 : vector<16x1xf32>
    %74 = vector.extract_strided_slice %66 {offsets = [64, 0], sizes = [16, 1], strides = [1, 1]} : vector<96x1xf32> to vector<16x1xf32>
    %75 = arith.addf %73, %74 : vector<16x1xf32>
    %76 = vector.extract_strided_slice %66 {offsets = [80, 0], sizes = [16, 1], strides = [1, 1]} : vector<96x1xf32> to vector<16x1xf32>
    %77 = arith.addf %75, %76 : vector<16x1xf32>
    %78 = tpu.reciprocal %77 {approx = true} : vector<16x1xf32> -> vector<16x1xf32>
    %79 = vector.extract_strided_slice %66 {offsets = [0, 0], sizes = [16, 1], strides = [1, 1]} : vector<96x1xf32> to vector<16x1xf32>
    %80 = arith.mulf %79, %78 : vector<16x1xf32>
    %c0_40 = arith.constant 0 : index
    %c0_41 = arith.constant 0 : index
    %81 = vector.load %arg7[%c0_40, %c0_41] : memref<96x32xf32, #tpu.memory_space<vmem>>, vector<16x32xf32>
    %82 = vector.broadcast %80 : vector<16x1xf32> to vector<16x32xf32>
    %83 = arith.mulf %82, %81 : vector<16x32xf32>
    %84 = vector.extract_strided_slice %66 {offsets = [16, 0], sizes = [16, 1], strides = [1, 1]} : vector<96x1xf32> to vector<16x1xf32>
    %85 = arith.mulf %84, %78 : vector<16x1xf32>
    %c16_42 = arith.constant 16 : index
    %c0_43 = arith.constant 0 : index
    %86 = vector.load %arg7[%c16_42, %c0_43] : memref<96x32xf32, #tpu.memory_space<vmem>>, vector<16x32xf32>
    %87 = vector.broadcast %85 : vector<16x1xf32> to vector<16x32xf32>
    %88 = arith.mulf %87, %86 : vector<16x32xf32>
    %89 = arith.addf %83, %88 : vector<16x32xf32>
    %90 = vector.extract_strided_slice %66 {offsets = [32, 0], sizes = [16, 1], strides = [1, 1]} : vector<96x1xf32> to vector<16x1xf32>
    %91 = arith.mulf %90, %78 : vector<16x1xf32>
    %c32_44 = arith.constant 32 : index
    %c0_45 = arith.constant 0 : index
    %92 = vector.load %arg7[%c32_44, %c0_45] : memref<96x32xf32, #tpu.memory_space<vmem>>, vector<16x32xf32>
    %93 = vector.broadcast %91 : vector<16x1xf32> to vector<16x32xf32>
    %94 = arith.mulf %93, %92 : vector<16x32xf32>
    %95 = arith.addf %89, %94 : vector<16x32xf32>
    %96 = vector.extract_strided_slice %66 {offsets = [48, 0], sizes = [16, 1], strides = [1, 1]} : vector<96x1xf32> to vector<16x1xf32>
    %97 = arith.mulf %96, %78 : vector<16x1xf32>
    %c48_46 = arith.constant 48 : index
    %c0_47 = arith.constant 0 : index
    %98 = vector.load %arg7[%c48_46, %c0_47] : memref<96x32xf32, #tpu.memory_space<vmem>>, vector<16x32xf32>
    %99 = vector.broadcast %97 : vector<16x1xf32> to vector<16x32xf32>
    %100 = arith.mulf %99, %98 : vector<16x32xf32>
    %101 = arith.addf %95, %100 : vector<16x32xf32>
    %102 = vector.extract_strided_slice %66 {offsets = [64, 0], sizes = [16, 1], strides = [1, 1]} : vector<96x1xf32> to vector<16x1xf32>
    %103 = arith.mulf %102, %78 : vector<16x1xf32>
    %c64_48 = arith.constant 64 : index
    %c0_49 = arith.constant 0 : index
    %104 = vector.load %arg7[%c64_48, %c0_49] : memref<96x32xf32, #tpu.memory_space<vmem>>, vector<16x32xf32>
    %105 = vector.broadcast %103 : vector<16x1xf32> to vector<16x32xf32>
    %106 = arith.mulf %105, %104 : vector<16x32xf32>
    %107 = arith.addf %101, %106 : vector<16x32xf32>
    %108 = vector.extract_strided_slice %66 {offsets = [80, 0], sizes = [16, 1], strides = [1, 1]} : vector<96x1xf32> to vector<16x1xf32>
    %109 = arith.mulf %108, %78 : vector<16x1xf32>
    %c80_50 = arith.constant 80 : index
    %c0_51 = arith.constant 0 : index
    %110 = vector.load %arg7[%c80_50, %c0_51] : memref<96x32xf32, #tpu.memory_space<vmem>>, vector<16x32xf32>
    %111 = vector.broadcast %109 : vector<16x1xf32> to vector<16x32xf32>
    %112 = arith.mulf %111, %110 : vector<16x32xf32>
    %113 = arith.addf %107, %112 : vector<16x32xf32>
    %114 = arith.truncf %113 : vector<16x32xf32> to vector<16x32xbf16>
    %c0_52 = arith.constant 0 : index
    %c0_53 = arith.constant 0 : index
    %115 = vector.load %arg5[%c0_52, %c0_53] : memref<32x128xbf16, #tpu.memory_space<vmem>>, vector<32x128xbf16>
    %cst_54 = arith.constant dense<0.000000e+00> : vector<16x128xf32>
    %116 = tpu.matmul %114, %115, %cst_54 {dimension_numbers = #tpu.dot_dimension_numbers<[1], [0], [0], [1], [0, 0, 1, 1], [], []>} : vector<16x32xbf16>, vector<32x128xbf16>, vector<16x128xf32> -> vector<16x128xf32>
    %c0_55 = arith.constant 0 : index
    %c0_56 = arith.constant 0 : index
    %117 = vector.load %arg2[%c0_55, %c0_56] : memref<16x128xf32, #tpu.memory_space<vmem>>, vector<16x128xf32>
    %118 = arith.addf %116, %117 : vector<16x128xf32>
    %119 = arith.negf %118 : vector<16x128xf32>
    %120 = math.exp %119 : vector<16x128xf32>
    %cst_57 = arith.constant 1.000000e+00 : f32
    %121 = vector.broadcast %cst_57 : f32 to vector<16x128xf32>
    %122 = arith.addf %121, %120 : vector<16x128xf32>
    %123 = arith.divf %121, %122 : vector<16x128xf32>
    %c0_58 = arith.constant 0 : index
    %c0_59 = arith.constant 0 : index
    %124 = vector.load %arg6[%c0_58, %c0_59] : memref<16x128xf32, #tpu.memory_space<vmem>>, vector<16x128xf32>
    tpu.vector_store %arg6[%c0_58, %c0_59], %123 {strides = array<i32>} : memref<16x128xf32, #tpu.memory_space<vmem>>, vector<16x128xf32>,
    return
  }
  func.func @transform_0(%arg0: i32) -> (i32, i32, i32) {
    %c0_i32 = arith.constant 0 : i32
    %c0_i32_0 = arith.constant 0 : i32
    %c0_i32_1 = arith.constant 0 : i32
    return %c0_i32, %arg0, %c0_i32_0 : i32, i32, i32
  }
  func.func @transform_1(%arg0: i32) -> (i32, i32) {
    %c0_i32 = arith.constant 0 : i32
    %c0_i32_0 = arith.constant 0 : i32
    return %arg0, %c0_i32 : i32, i32
  }
  func.func @transform_2(%arg0: i32) -> (i32, i32) {
    %c0_i32 = arith.constant 0 : i32
    %c0_i32_0 = arith.constant 0 : i32
    %c0_i32_1 = arith.constant 0 : i32
    return %c0_i32, %c0_i32_0 : i32, i32
  }
  func.func @transform_3(%arg0: i32) -> (i32, i32) {
    %c0_i32 = arith.constant 0 : i32
    %c0_i32_0 = arith.constant 0 : i32
    %c0_i32_1 = arith.constant 0 : i32
    return %c0_i32, %c0_i32_0 : i32, i32
  }
  func.func @transform_4(%arg0: i32) -> (i32, i32) {
    %c0_i32 = arith.constant 0 : i32
    %c0_i32_0 = arith.constant 0 : i32
    %c0_i32_1 = arith.constant 0 : i32
    return %c0_i32, %c0_i32_0 : i32, i32
  }
  func.func @transform_5(%arg0: i32) -> (i32, i32) {
    %c0_i32 = arith.constant 0 : i32
    %c0_i32_0 = arith.constant 0 : i32
    return %arg0, %c0_i32 : i32, i32
  }
}

</mosaic_0001>

<llo_original>
// kernel: tpu_custom_call.1
$region0: #{tpu_custom_call.1}
  #allocation0 [shape = 'u32[]', space=smem, size = 0x4, offset = 0x4, fixed_abs, tag = 'smem constant byte address 0x4 - core index']
  #allocation1 [shape = 'u32[144,128]{1,0:T(1,128)}', space=vmem, size = 0x12000, scoped, tag = 'internal scratch']
  #allocation2 [shape = 'f32[96,32]{1,0:T(8,128)}', space=vmem, size = 0xc000, scoped, tag = 'scratch operand']
  %s0 = inlined_call_operand.hbm [shape: bf16[4,16,32], index: 0, kind: input, shape index: {}]
  %s1 = inlined_call_operand.vmem [shape: f32[16,128], index: 1, kind: input, shape index: {}]
  %s2 = inlined_call_operand.vmem [shape: bf16[32,16], index: 2, kind: input, shape index: {}]
  %s3 = inlined_call_operand.vmem [shape: f32[2,16], index: 3, kind: input, shape index: {}]
  %s4 = inlined_call_operand.vmem [shape: bf16[32,128], index: 4, kind: input, shape index: {}]
  %s5 = inlined_call_operand.hbm [shape: f32[16,128], index: 5, kind: output, shape index: {}]
  %s6 = sld [smem:[#allocation0]]
  $region34: #{tpu_custom_call.1} parent=0
    _
  %s8 = ssub.s32 1, %s6
  %s9 = scalar_select 0, %s8, %s6
  $region1: #{tpu_custom_call.1} parent=0
    #allocation3 [shape = 'u8[16384]{0}', space=vmem, size = 0x4000, scoped, tag = 'input window, operand 0, single buffered']
    #allocation4 [shape = 's32[1]{0}', space=sflag, size = 0x4, scoped, tag = 'scoped memory for tpu_custom_call.1']
    #allocation5 [shape = 's32[1]{0}', space=sflag, size = 0x4, scoped, tag = 'scoped memory for tpu_custom_call.1']
    #allocation6 [shape = 'u8[8192]{0}', space=vmem, size = 0x2000, scoped, tag = 'output window, operand 0, single buffered']
    %10 = vsyncpa [#allocation4], 0
    %11 = vsyncpa [#allocation5], 0
    // Predicated region
    $region2: #{tpu_custom_call.1} parent=1 // pred_check
      _
    $region3: #{tpu_custom_call.1} parent=1 // pred_check_branch
      %13 = sbr.rel (0) target = $region5
    $region4: #{tpu_custom_call.1} parent=1 // pred_region
      %s15 = ssub.s32 512, 512
      %16 = vsyncadd [#allocation4], %s15
      %s17 = sshll.u32 [#allocation3], 4
      %s18 = int_to_ptr.vmem [resolvable:$true] %s17
      %23 = dma.hbm_to_vmem [thread:$0]  %s0, 512, %s18, [#allocation4], 64, 64, 4
    $region5: #{tpu_custom_call.1} parent=1 // pred_fallthru
      _
    // Predicated region
    $region6: #{tpu_custom_call.1} parent=1 // pred_check
      _
    $region7: #{tpu_custom_call.1} parent=1 // pred_check_branch
      %25 = sbr.rel (0) target = $region9
    $region8: #{tpu_custom_call.1} parent=1 // pred_region
      _
    $region9: #{tpu_custom_call.1} parent=1 // pred_fallthru
      _
    // Predicated region
    $region10: #{tpu_custom_call.1} parent=1 // pred_check
      _
    $region11: #{tpu_custom_call.1} parent=1 // pred_check_branch
      %27 = sbr.rel (0) target = $region13
    $region12: #{tpu_custom_call.1} parent=1 // pred_region
      _
    $region13: #{tpu_custom_call.1} parent=1 // pred_fallthru
      _
    // Predicated region
    $region14: #{tpu_custom_call.1} parent=1 // pred_check
      _
    $region15: #{tpu_custom_call.1} parent=1 // pred_check_branch
      %29 = sbr.rel (0) target = $region17
    $region16: #{tpu_custom_call.1} parent=1 // pred_region
      _
    $region17: #{tpu_custom_call.1} parent=1 // pred_fallthru
      _
    // Predicated region
    $region18: #{tpu_custom_call.1} parent=1 // pred_check
      _
    $region19: #{tpu_custom_call.1} parent=1 // pred_check_branch
      %31 = sbr.rel (0) target = $region21
    $region20: #{tpu_custom_call.1} parent=1 // pred_region
      _
    $region21: #{tpu_custom_call.1} parent=1 // pred_fallthru
      _
    // Predicated region
    $region22: #{tpu_custom_call.1} parent=1 // pred_check
      _
    $region23: #{tpu_custom_call.1} parent=1 // pred_check_branch
      %33 = sbr.rel (0) target = $region25
    $region24: #{tpu_custom_call.1} parent=1 // pred_region
      %34 = dma.done [#allocation4], 512
    $region25: #{tpu_custom_call.1} parent=1 // pred_fallthru
      _
    %v36 = vld [vmem:[%s3] sm:$0x1]
    %v37 = vld [vmem:[%s3 + $0x1] sm:$0x1]
    %v38 = vld [vmem:[#allocation3] sm:$0xf]
    %v39 = vld [vmem:[#allocation3 + $0x4] sm:$0xf]
    %v40 = vunpack.c.l.bf16 %v38
    %v41 = vunpack.c.l.bf16 %v39
    %s42 = scalar_lea.vmem [#allocation3], 8
    %v43 = vld [vmem:[%s42] sm:$0xf]
    %v44 = vld [vmem:[%s42 + $0x4] sm:$0xf]
    %v45 = vunpack.c.l.bf16 %v43
    %v46 = vunpack.c.l.bf16 %v44
    %v47 = vmul.f32 %v40, %v45
    %v48 = vmul.f32 %v41, %v46
    %vm49 = vcmask 261120
    %50 = vst.msk [vmem:[#allocation2] sm:$0xff] %vm49, %v47
    %51 = vst.msk [vmem:[#allocation2 + $0x8] sm:$0xff] %vm49, %v48
    %s52 = scalar_lea.vmem [#allocation3], 16
    %v53 = vld [vmem:[%s52] sm:$0xf]
    %v54 = vld [vmem:[%s52 + $0x4] sm:$0xf]
    %v55 = vunpack.c.l.bf16 %v53
    %v56 = vunpack.c.l.bf16 %v54
    %v57 = vmul.f32 %v40, %v55
    %v58 = vmul.f32 %v41, %v56
    %59 = vst.msk [vmem:[#allocation2 + $0x10] sm:$0xff] %vm49, %v57
    %60 = vst.msk [vmem:[#allocation2 + $0x18] sm:$0xff] %vm49, %v58
    %s61 = scalar_lea.vmem [#allocation3], 24
    %v62 = vld [vmem:[%s61] sm:$0xf]
    %v63 = vld [vmem:[%s61 + $0x4] sm:$0xf]
    %v64 = vunpack.c.l.bf16 %v62
    %v65 = vunpack.c.l.bf16 %v63
    %v66 = vmul.f32 %v40, %v64
    %v67 = vmul.f32 %v41, %v65
    %68 = vst.msk [vmem:[#allocation2 + $0x20] sm:$0xff] %vm49, %v66
    %69 = vst.msk [vmem:[#allocation2 + $0x28] sm:$0xff] %vm49, %v67
    %v70 = vld [vmem:[%s42] sm:$0xf]
    %v71 = vld [vmem:[%s42 + $0x4] sm:$0xf]
    %v72 = vunpack.c.l.bf16 %v70
    %v73 = vunpack.c.l.bf16 %v71
    %v74 = vld [vmem:[%s52] sm:$0xf]
    %v75 = vld [vmem:[%s52 + $0x4] sm:$0xf]
    %v76 = vunpack.c.l.bf16 %v74
    %v77 = vunpack.c.l.bf16 %v75
    %v78 = vmul.f32 %v72, %v76
    %v79 = vmul.f32 %v73, %v77
    %80 = vst.msk [vmem:[#allocation2 + $0x30] sm:$0xff] %vm49, %v78
    %81 = vst.msk [vmem:[#allocation2 + $0x38] sm:$0xff] %vm49, %v79
    %v82 = vld [vmem:[%s61] sm:$0xf]
    %v83 = vld [vmem:[%s61 + $0x4] sm:$0xf]
    %v84 = vunpack.c.l.bf16 %v82
    %v85 = vunpack.c.l.bf16 %v83
    %v86 = vmul.f32 %v72, %v84
    %v87 = vmul.f32 %v73, %v85
    %88 = vst.msk [vmem:[#allocation2 + $0x40] sm:$0xff] %vm49, %v86
    %89 = vst.msk [vmem:[#allocation2 + $0x48] sm:$0xff] %vm49, %v87
    %v90 = vld [vmem:[%s52] sm:$0xf]
    %v91 = vld [vmem:[%s52 + $0x4] sm:$0xf]
    %v92 = vunpack.c.l.bf16 %v90
    %v93 = vunpack.c.l.bf16 %v91
    %v94 = vld [vmem:[%s61] sm:$0xf]
    %v95 = vld [vmem:[%s61 + $0x4] sm:$0xf]
    %v96 = vunpack.c.l.bf16 %v94
    %v97 = vunpack.c.l.bf16 %v95
    %v98 = vmul.f32 %v92, %v96
    %v99 = vmul.f32 %v93, %v97
    %100 = vst.msk [vmem:[#allocation2 + $0x50] sm:$0xff] %vm49, %v98
    %101 = vst.msk [vmem:[#allocation2 + $0x58] sm:$0xff] %vm49, %v99
    %v102 = vld [vmem:[#allocation2] sm:$0xff]
    %v103 = vld [vmem:[#allocation2 + $0x8] sm:$0xff]
    %v104 = vld [vmem:[#allocation2 + $0x10] sm:$0xff]
    %v105 = vld [vmem:[#allocation2 + $0x18] sm:$0xff]
    %v106 = vld [vmem:[#allocation2 + $0x20] sm:$0xff]
    %v107 = vld [vmem:[#allocation2 + $0x28] sm:$0xff]
    %v108 = vld [vmem:[#allocation2 + $0x30] sm:$0xff]
    %v109 = vld [vmem:[#allocation2 + $0x38] sm:$0xff]
    %v110 = vld [vmem:[#allocation2 + $0x40] sm:$0xff]
    %v111 = vld [vmem:[#allocation2 + $0x48] sm:$0xff]
    %v112 = vld [vmem:[#allocation2 + $0x50] sm:$0xff]
    %v113 = vld [vmem:[#allocation2 + $0x58] sm:$0xff]
    %v114 = vpack.c.bf16 %v103, %v102
    %v115 = vpack.c.bf16 %v105, %v104
    %v116 = vpack.c.bf16 %v107, %v106
    %v117 = vpack.c.bf16 %v109, %v108
    %v118 = vpack.c.bf16 %v111, %v110
    %v119 = vpack.c.bf16 %v113, %v112
    %v120 = vld [vmem:[%s2] sm:$0xf]
    %v121 = vld [vmem:[%s2 + $0x4] sm:$0xf]
    %v122 = vld [vmem:[%s2 + $0x8] sm:$0xf]
    %v123 = vld [vmem:[%s2 + $0xc] sm:$0xf]
    %v124 = vlaneseq
    %v125 = vshrl.u32 %v124, 7
    %v126 = vsub.s32 0, %v125
    %v127 = vrot.slane %v36, %v126
    %v132 = vunpack.c.l.b16 %v120
    %v133 = vunpack.c.l.b16 %v121
    %v134 = vunpack.c.l.b16 %v122
    %v135 = vunpack.c.l.b16 %v123
    %v136 = vpack.c.b16 %v133, %v132
    %v137 = vpack.c.b16 %v135, %v134
    %v141 = vsel %vm49, %v114, 0
    %v144 = vsel %vm49, %v115, 0
    %v147 = vsel %vm49, %v116, 0
    %v150 = vsel %vm49, %v117, 0
    %v153 = vsel %vm49, %v118, 0
    %v156 = vsel %vm49, %v119, 0
    %158 = vmatprep.subr.bf16.mxu0 0
    %159 = vmatpush1.bf16.msra.mxu0 %v136
    %160 = vmatprep.subr.bf16.mxu0 0
    %161 = vmatpush1.bf16.msra.mxu0 %v137
    %162 = vmatprep.subr.bf16.mxu0 0
    %163 = vmatpush1.bf16.msra.mxu0 0
    %164 = vmatprep.subr.bf16.mxu0 0
    %165 = vmatpush1.bf16.msra.mxu0 0
    %166 = vmatprep.subr.bf16.mxu0 0
    %167 = vmatpush1.bf16.msra.mxu0 0
    %168 = vmatprep.subr.bf16.mxu0 0
    %169 = vmatpush1.bf16.msra.mxu0 0
    %170 = vmatprep.subr.bf16.mxu0 0
    %171 = vmatpush1.bf16.msra.mxu0 0
    %172 = vmatprep.subr.bf16.mxu0 0
    %173 = vmatpush1.bf16.msra.mxu0 0
    %174 = vmatprep.subr.bf16.mxu0 0
    %175 = vmatpush1.bf16.msra.mxu0 0
    %176 = vmatprep.subr.bf16.mxu0 0
    %177 = vmatpush1.bf16.msra.mxu0 0
    %178 = vmatprep.subr.bf16.mxu0 0
    %179 = vmatpush1.bf16.msra.mxu0 0
    %180 = vmatprep.subr.bf16.mxu0 0
    %181 = vmatpush1.bf16.msra.mxu0 0
    %182 = vmatprep.subr.bf16.mxu0 0
    %183 = vmatpush1.bf16.msra.mxu0 0
    %184 = vmatprep.subr.bf16.mxu0 0
    %185 = vmatpush1.bf16.msra.mxu0 0
    %186 = vmatprep.subr.bf16.mxu0 0
    %187 = vmatpush1.bf16.msra.mxu0 0
    %188 = vmatprep.subr.bf16.mxu0 0
    %189 = vmatpush1.bf16.msra.mxu0 0
    %190 = vmatprep.mubr.bf16.mxu0 0
    %191 = vmatmul.mubr.bf16.gmra.mrb[0].mxu0 %v141
    %v192 = vpop.f32.mrb[0].mxu0
    %v193 = vadd.f32 %v127, %v192
    %v194 = vpop.f32.mrb[0].mxu0
    %v195 = vpop.f32.mrb[0].mxu0
    %v196 = vadd.f32 %v127, %v195
    %v197 = vpop.f32.mrb[0].mxu0
    %198 = vmatprep.mubr.bf16.mxu0 0
    %199 = vmatmul.mubr.bf16.gmra.mrb[0].mxu0 %v144
    %v200 = vpop.f32.mrb[0].mxu0
    %v201 = vadd.f32 %v127, %v200
    %v202 = vpop.f32.mrb[0].mxu0
    %v203 = vpop.f32.mrb[0].mxu0
    %v204 = vadd.f32 %v127, %v203
    %v205 = vpop.f32.mrb[0].mxu0
    %206 = vmatprep.mubr.bf16.mxu0 0
    %207 = vmatmul.mubr.bf16.gmra.mrb[0].mxu0 %v147
    %v208 = vpop.f32.mrb[0].mxu0
    %v209 = vadd.f32 %v127, %v208
    %v210 = vpop.f32.mrb[0].mxu0
    %v211 = vpop.f32.mrb[0].mxu0
    %v212 = vadd.f32 %v127, %v211
    %v213 = vpop.f32.mrb[0].mxu0
    %214 = vmatprep.mubr.bf16.mxu0 0
    %215 = vmatmul.mubr.bf16.gmra.mrb[0].mxu0 %v150
    %v216 = vpop.f32.mrb[0].mxu0
    %v217 = vadd.f32 %v127, %v216
    %v218 = vpop.f32.mrb[0].mxu0
    %v219 = vpop.f32.mrb[0].mxu0
    %v220 = vadd.f32 %v127, %v219
    %v221 = vpop.f32.mrb[0].mxu0
    %222 = vmatprep.mubr.bf16.mxu0 0
    %223 = vmatmul.mubr.bf16.gmra.mrb[0].mxu0 %v153
    %v224 = vpop.f32.mrb[0].mxu0
    %v225 = vadd.f32 %v127, %v224
    %v226 = vpop.f32.mrb[0].mxu0
    %v227 = vpop.f32.mrb[0].mxu0
    %v228 = vadd.f32 %v127, %v227
    %v229 = vpop.f32.mrb[0].mxu0
    %230 = vmatprep.mubr.bf16.mxu0 0
    %231 = vmatmul.mubr.bf16.gmra.mrb[0].mxu0 %v156
    %v232 = vpop.f32.mrb[0].mxu0
    %v233 = vadd.f32 %v127, %v232
    %v234 = vpop.f32.mrb[0].mxu0
    %v235 = vpop.f32.mrb[0].mxu0
    %v236 = vadd.f32 %v127, %v235
    %v237 = vpop.f32.mrb[0].mxu0
    %238 = vdwg.mxu0
    %v239 = vmax.f32 %v193, 0.0
    %v240 = vmax.f32 %v196, 0.0
    %v241 = vmax.f32 %v201, 0.0
    %v242 = vmax.f32 %v204, 0.0
    %v243 = vmax.f32 %v209, 0.0
    %v244 = vmax.f32 %v212, 0.0
    %v245 = vmax.f32 %v217, 0.0
    %v246 = vmax.f32 %v220, 0.0
    %v247 = vmax.f32 %v225, 0.0
    %v248 = vmax.f32 %v228, 0.0
    %v249 = vmax.f32 %v233, 0.0
    %v250 = vmax.f32 %v236, 0.0
    %v251 = vlaneseq
    %v252 = vshrl.u32 %v251, 7
    %v253 = vsub.s32 0, %v252
    %v254 = vrot.slane %v37, %v253
    %v255 = vmul.f32 %v239, %v254
    %v256 = vmul.f32 %v240, %v254
    %v257 = vmul.f32 %v241, %v254
    %v258 = vmul.f32 %v242, %v254
    %v259 = vmul.f32 %v243, %v254
    %v260 = vmul.f32 %v244, %v254
    %v261 = vmul.f32 %v245, %v254
    %v262 = vmul.f32 %v246, %v254
    %v263 = vmul.f32 %v247, %v254
    %v264 = vmul.f32 %v248, %v254
    %v265 = vmul.f32 %v249, %v254
    %v266 = vmul.f32 %v250, %v254
    %vm267 = vcmask 130048
    %v268 = vsel %vm267, %v255, 0.0
    %269 = vadd.xlane.f32.xlu0 %v268
    %v270 = vpop.xlane.xlu0 %269
    %v271 = vsel %vm267, %v256, 0.0
    %272 = vadd.xlane.f32.xlu0 %v271
    %v273 = vpop.xlane.xlu0 %272
    %v274 = vsel %vm267, %v257, 0.0
    %275 = vadd.xlane.f32.xlu0 %v274
    %v276 = vpop.xlane.xlu0 %275
    %v277 = vsel %vm267, %v258, 0.0
    %278 = vadd.xlane.f32.xlu0 %v277
    %v279 = vpop.xlane.xlu0 %278
    %v280 = vsel %vm267, %v259, 0.0
    %281 = vadd.xlane.f32.xlu0 %v280
    %v282 = vpop.xlane.xlu0 %281
    %v283 = vsel %vm267, %v260, 0.0
    %284 = vadd.xlane.f32.xlu0 %v283
    %v285 = vpop.xlane.xlu0 %284
    %v286 = vsel %vm267, %v261, 0.0
    %287 = vadd.xlane.f32.xlu0 %v286
    %v288 = vpop.xlane.xlu0 %287
    %v289 = vsel %vm267, %v262, 0.0
    %290 = vadd.xlane.f32.xlu0 %v289
    %v291 = vpop.xlane.xlu0 %290
    %v292 = vsel %vm267, %v263, 0.0
    %293 = vadd.xlane.f32.xlu0 %v292
    %v294 = vpop.xlane.xlu0 %293
    %v295 = vsel %vm267, %v264, 0.0
    %296 = vadd.xlane.f32.xlu0 %v295
    %v297 = vpop.xlane.xlu0 %296
    %v298 = vsel %vm267, %v265, 0.0
    %299 = vadd.xlane.f32.xlu0 %v298
    %v300 = vpop.xlane.xlu0 %299
    %v301 = vsel %vm267, %v266, 0.0
    %302 = vadd.xlane.f32.xlu0 %v301
    %v303 = vpop.xlane.xlu0 %302
    %v304 = vmax.f32 %v270, %v276
    %v305 = vmax.f32 %v273, %v279
    %v306 = vmax.f32 %v304, %v282
    %v307 = vmax.f32 %v305, %v285
    %v308 = vmax.f32 %v306, %v288
    %v309 = vmax.f32 %v307, %v291
    %v310 = vmax.f32 %v308, %v294
    %v311 = vmax.f32 %v309, %v297
    %v312 = vmax.f32 %v310, %v300
    %v313 = vmax.f32 %v311, %v303
    %v314 = vsub.f32 %v270, %v312
    %v315 = vsub.f32 %v273, %v313
    %v316 = vsub.f32 %v276, %v312
    %v317 = vsub.f32 %v279, %v313
    %v318 = vsub.f32 %v282, %v312
    %v319 = vsub.f32 %v285, %v313
    %v320 = vsub.f32 %v288, %v312
    %v321 = vsub.f32 %v291, %v313
    %v322 = vsub.f32 %v294, %v312
    %v323 = vsub.f32 %v297, %v313
    %v324 = vsub.f32 %v300, %v312
    %v325 = vsub.f32 %v303, %v313
    %v326 = vmul.f32 %v314, 1.442695
    %v327 = vpow.pop %v326
    %v328 = vmul.f32 %v315, 1.442695
    %v329 = vpow.pop %v328
    %v330 = vmul.f32 %v316, 1.442695
    %v331 = vpow.pop %v330
    %v332 = vmul.f32 %v317, 1.442695
    %v333 = vpow.pop %v332
    %v334 = vmul.f32 %v318, 1.442695
    %v335 = vpow.pop %v334
    %v336 = vmul.f32 %v319, 1.442695
    %v337 = vpow.pop %v336
    %v338 = vmul.f32 %v320, 1.442695
    %v339 = vpow.pop %v338
    %v340 = vmul.f32 %v321, 1.442695
    %v341 = vpow.pop %v340
    %v342 = vmul.f32 %v322, 1.442695
    %v343 = vpow.pop %v342
    %v344 = vmul.f32 %v323, 1.442695
    %v345 = vpow.pop %v344
    %v346 = vmul.f32 %v324, 1.442695
    %v347 = vpow.pop %v346
    %v348 = vmul.f32 %v325, 1.442695
    %v349 = vpow.pop %v348
    %v350 = vadd.f32 %v327, %v331
    %v351 = vadd.f32 %v329, %v333
    %v352 = vadd.f32 %v350, %v335
    %v353 = vadd.f32 %v351, %v337
    %v354 = vadd.f32 %v352, %v339
    %v355 = vadd.f32 %v353, %v341
    %v356 = vadd.f32 %v354, %v343
    %v357 = vadd.f32 %v355, %v345
    %v358 = vadd.f32 %v356, %v347
    %v359 = vadd.f32 %v357, %v349
    %v360 = vrcp.pop %v358
    %v361 = vrcp.pop %v359
    %v362 = vmul.f32 %v327, %v360
    %v363 = vmul.f32 %v329, %v361
    %v364 = vld [vmem:[#allocation2] sm:$0xff]
    %v365 = vld [vmem:[#allocation2 + $0x8] sm:$0xff]
    %367 = vset.pattern.permute.xlu0 0
    %368 = vperm.xlu0 %367, %v362
    %v369 = vpop.permute.xlu0 %368
    %372 = vset.pattern.permute.xlu0 0
    %373 = vperm.xlu0 %372, %v363
    %v374 = vpop.permute.xlu0 %373
    %v376 = vmul.f32 %v369, %v364
    %v377 = vmul.f32 %v374, %v365
    %v378 = vmul.f32 %v331, %v360
    %v379 = vmul.f32 %v333, %v361
    %v380 = vld [vmem:[#allocation2 + $0x10] sm:$0xff]
    %v381 = vld [vmem:[#allocation2 + $0x18] sm:$0xff]
    %383 = vset.pattern.permute.xlu0 0
    %384 = vperm.xlu0 %383, %v378
    %v385 = vpop.permute.xlu0 %384
    %388 = vset.pattern.permute.xlu0 0
    %389 = vperm.xlu0 %388, %v379
    %v390 = vpop.permute.xlu0 %389
    %v392 = vmul.f32 %v385, %v380
    %v393 = vmul.f32 %v390, %v381
    %v394 = vadd.f32 %v376, %v392
    %v395 = vadd.f32 %v377, %v393
    %v396 = vmul.f32 %v335, %v360
    %v397 = vmul.f32 %v337, %v361
    %v398 = vld [vmem:[#allocation2 + $0x20] sm:$0xff]
    %v399 = vld [vmem:[#allocation2 + $0x28] sm:$0xff]
    %401 = vset.pattern.permute.xlu0 0
    %402 = vperm.xlu0 %401, %v396
    %v403 = vpop.permute.xlu0 %402
    %406 = vset.pattern.permute.xlu0 0
    %407 = vperm.xlu0 %406, %v397
    %v408 = vpop.permute.xlu0 %407
    %v410 = vmul.f32 %v403, %v398
    %v411 = vmul.f32 %v408, %v399
    %v412 = vadd.f32 %v394, %v410
    %v413 = vadd.f32 %v395, %v411
    %v414 = vmul.f32 %v339, %v360
    %v415 = vmul.f32 %v341, %v361
    %v416 = vld [vmem:[#allocation2 + $0x30] sm:$0xff]
    %v417 = vld [vmem:[#allocation2 + $0x38] sm:$0xff]
    %419 = vset.pattern.permute.xlu0 0
    %420 = vperm.xlu0 %419, %v414
    %v421 = vpop.permute.xlu0 %420
    %424 = vset.pattern.permute.xlu0 0
    %425 = vperm.xlu0 %424, %v415
    %v426 = vpop.permute.xlu0 %425
    %v428 = vmul.f32 %v421, %v416
    %v429 = vmul.f32 %v426, %v417
    %v430 = vadd.f32 %v412, %v428
    %v431 = vadd.f32 %v413, %v429
    %v432 = vmul.f32 %v343, %v360
    %v433 = vmul.f32 %v345, %v361
    %v434 = vld [vmem:[#allocation2 + $0x40] sm:$0xff]
    %v435 = vld [vmem:[#allocation2 + $0x48] sm:$0xff]
    %437 = vset.pattern.permute.xlu0 0
    %438 = vperm.xlu0 %437, %v432
    %v439 = vpop.permute.xlu0 %438
    %442 = vset.pattern.permute.xlu0 0
    %443 = vperm.xlu0 %442, %v433
    %v444 = vpop.permute.xlu0 %443
    %v446 = vmul.f32 %v439, %v434
    %v447 = vmul.f32 %v444, %v435
    %v448 = vadd.f32 %v430, %v446
    %v449 = vadd.f32 %v431, %v447
    %v450 = vmul.f32 %v347, %v360
    %v451 = vmul.f32 %v349, %v361
    %453 = vset.pattern.permute.xlu0 0
    %454 = vperm.xlu0 %453, %v450
    %v455 = vpop.permute.xlu0 %454
    %458 = vset.pattern.permute.xlu0 0
    %459 = vperm.xlu0 %458, %v451
    %v460 = vpop.permute.xlu0 %459
    %v462 = vmul.f32 %v455, %v112
    %v463 = vmul.f32 %v460, %v113
    %v464 = vadd.f32 %v448, %v462
    %v465 = vadd.f32 %v449, %v463
    %v466 = vpack.c.bf16 %v465, %v464
    %v467 = vld [vmem:[%s4] sm:$0xf]
    %v468 = vld [vmem:[%s4 + $0x4] sm:$0xf]
    %v469 = vld [vmem:[%s4 + $0x8] sm:$0xf]
    %v470 = vld [vmem:[%s4 + $0xc] sm:$0xf]
    %v471 = vld [vmem:[%s1] sm:$0xff]
    %v472 = vld [vmem:[%s1 + $0x8] sm:$0xff]
    %v477 = vunpack.c.l.b16 %v467
    %v478 = vunpack.c.l.b16 %v468
    %v479 = vunpack.c.l.b16 %v469
    %v480 = vunpack.c.l.b16 %v470
    %v481 = vpack.c.b16 %v478, %v477
    %v482 = vpack.c.b16 %v480, %v479
    %v486 = vsel %vm49, %v466, 0
    %488 = vmatprep.subr.bf16.mxu0 0
    %489 = vmatpush1.bf16.msra.mxu0 %v481
    %490 = vmatprep.subr.bf16.mxu0 0
    %491 = vmatpush1.bf16.msra.mxu0 %v482
    %492 = vmatprep.subr.bf16.mxu0 0
    %493 = vmatpush1.bf16.msra.mxu0 0
    %494 = vmatprep.subr.bf16.mxu0 0
    %495 = vmatpush1.bf16.msra.mxu0 0
    %496 = vmatprep.subr.bf16.mxu0 0
    %497 = vmatpush1.bf16.msra.mxu0 0
    %498 = vmatprep.subr.bf16.mxu0 0
    %499 = vmatpush1.bf16.msra.mxu0 0
    %500 = vmatprep.subr.bf16.mxu0 0
    %501 = vmatpush1.bf16.msra.mxu0 0
    %502 = vmatprep.subr.bf16.mxu0 0
    %503 = vmatpush1.bf16.msra.mxu0 0
    %504 = vmatprep.subr.bf16.mxu0 0
    %505 = vmatpush1.bf16.msra.mxu0 0
    %506 = vmatprep.subr.bf16.mxu0 0
    %507 = vmatpush1.bf16.msra.mxu0 0
    %508 = vmatprep.subr.bf16.mxu0 0
    %509 = vmatpush1.bf16.msra.mxu0 0
    %510 = vmatprep.subr.bf16.mxu0 0
    %511 = vmatpush1.bf16.msra.mxu0 0
    %512 = vmatprep.subr.bf16.mxu0 0
    %513 = vmatpush1.bf16.msra.mxu0 0
    %514 = vmatprep.subr.bf16.mxu0 0
    %515 = vmatpush1.bf16.msra.mxu0 0
    %516 = vmatprep.subr.bf16.mxu0 0
    %517 = vmatpush1.bf16.msra.mxu0 0
    %518 = vmatprep.subr.bf16.mxu0 0
    %519 = vmatpush1.bf16.msra.mxu0 0
    %520 = vmatprep.mubr.bf16.mxu0 0
    %521 = vmatmul.mubr.bf16.gmra.mrb[0].mxu0 %v486
    %v522 = vpop.f32.mrb[0].mxu0
    %v523 = vadd.f32 %v471, %v522
    %v524 = vpop.f32.mrb[0].mxu0
    %v525 = vpop.f32.mrb[0].mxu0
    %v526 = vadd.f32 %v472, %v525
    %v527 = vpop.f32.mrb[0].mxu0
    %528 = vdwg.mxu0
    %v529 = vxor.u32 %v523, 2147483648
    %v530 = vxor.u32 %v526, 2147483648
    %v531 = vmul.f32 %v529, 1.442695
    %v532 = vpow.pop %v531
    %v533 = vmul.f32 %v530, 1.442695
    %v534 = vpow.pop %v533
    %v535 = vadd.f32 %v532, 1.0
    %v536 = vadd.f32 %v534, 1.0
    %v537 = vrcp.pop %v535
    %v538 = vmul.f32 1.0, %v537
    %v539 = vrcp.pop %v536
    %v540 = vmul.f32 1.0, %v539
    %541 = vst [vmem:[#allocation6] sm:$0xff] %v538
    %542 = vst [vmem:[#allocation6 + $0x8] sm:$0xff] %v540
    // Predicated region
    $region26: #{tpu_custom_call.1} parent=1 // pred_check
      _
    $region27: #{tpu_custom_call.1} parent=1 // pred_check_branch
      %544 = sbr.rel (0) target = $region29
    $region28: #{tpu_custom_call.1} parent=1 // pred_region
      %s546 = ssub.s32 256, 256
      %547 = vsyncadd [#allocation5], %s546
      %s548 = sshll.u32 [#allocation6], 4
      %s549 = int_to_ptr.vmem [resolvable:$true] %s548
      %554 = dma.vmem_to_hbm [thread:$0]  %s549, 256, %s5, [#allocation5], 128, 128, 8
    $region29: #{tpu_custom_call.1} parent=1 // pred_fallthru
      _
    // Predicated region
    $region30: #{tpu_custom_call.1} parent=1 // pred_check
      _
    $region31: #{tpu_custom_call.1} parent=1 // pred_check_branch
      %556 = sbr.rel (0) target = $region33
    $region32: #{tpu_custom_call.1} parent=1 // pred_region
      %557 = dma.done [#allocation5], 256
    $region33: #{tpu_custom_call.1} parent=1 // pred_fallthru
      _
    %558 = vsyncpa [#allocation4], 1
    %559 = vsyncpa [#allocation5], 1

</llo_original>
